<compile_context>
chip_gen: v5e
topology: v5e:2x2
jax: 0.10.0
libtpu: 0.0.40
codegen_flags: <defaults>
</compile_context>

<pallas_src>
import functools

import jax
import jax.numpy as jnp
from jax.experimental import pallas as pl
from jax.experimental.pallas import tpu as pltpu

# TODO(synk): pretrained BertModel('bert-base-chinese') forward has no clean
# Pallas equivalent (external checkpoint); the kernel consumes the CLS
# embedding [B, 768] directly.

HIDDEN = 768
NUM_CLASSES = 2
N_PAD = 128  # lane-dense padded class dimension


def _round_up(x, m):
    return (x + m - 1) // m * m


def _head_kernel(x_ref, w_ref, b_ref, o_ref):
    # f32 activations read straight from HBM; cast to bf16 in-register for the
    # MXU (bf16 [TB, 768] @ bf16 [768, 128] -> f32 [TB, 128]).
    x = x_ref[...].astype(jnp.bfloat16)
    logits = jnp.dot(x, w_ref[...], preferred_element_type=jnp.float32)
    logits = logits + b_ref[...]          # padded lanes carry -1e30 bias
    m = jnp.max(logits, axis=-1, keepdims=True)
    e = jnp.exp(logits - m)               # padded lanes underflow to 0
    s = jnp.sum(e, axis=-1, keepdims=True)
    # Exact divide: keeps each softmax row summing to 1 within f32 rounding
    # (approx reciprocal broke the row-sum invariant); kernel is HBM-bound so
    # the divide is hidden behind the x-tile DMA.
    o_ref[...] = e / s


def prepare_head_params(conv_w, conv_b, fc_w, fc_b):
    """Fold Conv1d(1,1,1) into the FC layer and pad to lane-dense N=128.

    Call ONCE when parameters are created; the results are resident constants.
    """
    cw = jnp.reshape(jnp.asarray(conv_w, jnp.float32), ())
    cb = jnp.reshape(jnp.asarray(conv_b, jnp.float32), ())
    fc_w = jnp.asarray(fc_w, jnp.float32)   # [2, 768]
    fc_b = jnp.asarray(fc_b, jnp.float32)   # [2]

    # (cw*x + cb) @ W.T + b == x @ (cw*W).T + (b + cb * W.sum(axis=1))
    w_eff = cw * fc_w                                   # [2, 768]
    b_eff = fc_b + cb * jnp.sum(fc_w, axis=1)           # [2]

    # Zero-padded weight columns + -1e30 bias in padded lanes => padded logits
    # are -1e30 and contribute exactly 0 to the softmax.
    w_pad = (jnp.zeros((HIDDEN, N_PAD), jnp.bfloat16)
             .at[:, :NUM_CLASSES].set(w_eff.T.astype(jnp.bfloat16)))
    b_pad = (jnp.full((1, N_PAD), -1e30, jnp.float32)
             .at[0, :NUM_CLASSES].set(b_eff))
    return w_pad, b_pad


@functools.partial(jax.jit, static_argnames=("block_b",))
def cls_head(cls_emb, w_pad, b_pad, *, block_b=1024):
    """cls_emb: [B, 768] f32; w_pad: [768, 128] bf16; b_pad: [1, 128] f32."""
    B = cls_emb.shape[0]

    # Pad at most 7 rows (f32 sublane multiple), never a full tile.
    b_aligned = _round_up(B, 8)
    x = cls_emb
    if b_aligned != B:
        x = jnp.pad(x, ((0, b_aligned - B), (0, 0)))

    # Tile rows: multiple of 8, capped at the (aligned) batch.  Ragged last
    # tiles are handled by Pallas block masking via the cdiv grid.
    tb = min(_round_up(block_b, 8), b_aligned)
    grid = (pl.cdiv(b_aligned, tb),)

    out = pl.pallas_call(
        _head_kernel,
        out_shape=jax.ShapeDtypeStruct((b_aligned, N_PAD), jnp.float32),
        grid=grid,
        in_specs=[
            pl.BlockSpec((tb, HIDDEN), lambda i: (i, 0)),     # x tile (pipelined)
            pl.BlockSpec((HIDDEN, N_PAD), lambda i: (0, 0)),  # folded weight
            pl.BlockSpec((1, N_PAD), lambda i: (0, 0)),       # folded/masked bias
        ],
        out_specs=pl.BlockSpec((tb, N_PAD), lambda i: (i, 0)),
        compiler_params=pltpu.CompilerParams(
            dimension_semantics=("parallel",)),
    )(x, w_pad, b_pad)

    # Rows >= B of a ragged last tile contain garbage softmax; they are sliced
    # off here and must not be reduced over downstream.
    return out[:B, :NUM_CLASSES]


def reference(cls_emb, conv_w, conv_b, fc_w, fc_b):
    y = cls_emb * jnp.reshape(conv_w, ()) + jnp.reshape(conv_b, ())
    logits = y @ fc_w.T + fc_b
    return jax.nn.softmax(logits, axis=1)


if __name__ == "__main__":
    key = jax.random.PRNGKey(0)
    k_x, k_cw, k_cb, k_w, k_b = jax.random.split(key, 5)

    B = 8  # small batch

    # Synthetic stand-in for pretrained BERT's last_hidden_state[:, 0].
    cls_emb = jax.random.normal(k_x, (B, HIDDEN), jnp.float32)

    # Parameter shapes per nn.Conv1d(1, 1, 1) / nn.Linear(768, 2).
    conv_w = jax.random.normal(k_cw, (1, 1, 1), jnp.float32) * 0.1
    conv_b = jax.random.normal(k_cb, (1,), jnp.float32) * 0.1
    fc_w = jax.random.normal(k_w, (NUM_CLASSES, HIDDEN), jnp.float32) * 0.02
    fc_b = jax.random.normal(k_b, (NUM_CLASSES,), jnp.float32) * 0.02

    # One-time parameter preparation (folding + padding), then the kernel.
    w_pad, b_pad = prepare_head_params(conv_w, conv_b, fc_w, fc_b)
    out = cls_head(cls_emb, w_pad, b_pad)
    out = jax.block_until_ready(out)

    ref = reference(cls_emb, conv_w, conv_b, fc_w, fc_b)
    assert out.shape == (B, NUM_CLASSES)
    # bf16 activations/weights in the dot -> modest tolerance vs f32 ref.
    assert jnp.allclose(out, ref, atol=5e-3, rtol=0.0), (out, ref)
    # Exact f32 normalization -> rows sum to 1 within f32 rounding.
    assert jnp.allclose(out.sum(axis=1), 1.0, atol=1e-3)

    print("KERNEL_OK")
</pallas_src>

<mosaic_0001>
module attributes {stable_mosaic.version = 11 : i64} {
  func.func @_head_kernel(%arg0: i32, %arg1: memref<8x768xf32, #tpu.memory_space<vmem>>, %arg2: memref<768x128xbf16, #tpu.memory_space<vmem>>, %arg3: memref<1x128xf32, #tpu.memory_space<vmem>>, %arg4: memref<8x128xf32, #tpu.memory_space<vmem>>) attributes {dimension_semantics = [#tpu.dimension_semantics<parallel>], iteration_bounds = array<i64: 1>, scalar_prefetch = 0 : i64, scratch_operands = 0 : i64, tpu.core_type = #tpu.core_type<tc>, window_params = [{transform_indices = @transform_0, window_bounds = array<i64: 8, 768>}, {pipeline_mode = #tpu.pipeline_mode<synchronous>, transform_indices = @transform_1, window_bounds = array<i64: 768, 128>}, {pipeline_mode = #tpu.pipeline_mode<synchronous>, transform_indices = @transform_2, window_bounds = array<i64: 1, 128>}, {transform_indices = @transform_3, window_bounds = array<i64: 8, 128>}]} {
    %c0 = arith.constant 0 : index
    %c0_0 = arith.constant 0 : index
    %0 = vector.load %arg1[%c0, %c0_0] : memref<8x768xf32, #tpu.memory_space<vmem>>, vector<8x768xf32>
    %1 = arith.truncf %0 : vector<8x768xf32> to vector<8x768xbf16>
    %c0_1 = arith.constant 0 : index
    %c0_2 = arith.constant 0 : index
    %2 = vector.load %arg2[%c0_1, %c0_2] : memref<768x128xbf16, #tpu.memory_space<vmem>>, vector<768x128xbf16>
    %cst = arith.constant dense<0.000000e+00> : vector<8x128xf32>
    %3 = tpu.matmul %1, %2, %cst {dimension_numbers = #tpu.dot_dimension_numbers<[1], [0], [0], [1], [0, 0, 1, 1], [], []>} : vector<8x768xbf16>, vector<768x128xbf16>, vector<8x128xf32> -> vector<8x128xf32>
    %c0_3 = arith.constant 0 : index
    %c0_4 = arith.constant 0 : index
    %4 = vector.load %arg3[%c0_3, %c0_4] : memref<1x128xf32, #tpu.memory_space<vmem>>, vector<1x128xf32>
    %5 = vector.broadcast %4 : vector<1x128xf32> to vector<8x128xf32>
    %6 = arith.addf %3, %5 : vector<8x128xf32>
    %cst_5 = arith.constant dense<0xFF800000> : vector<8xf32>
    %7 = vector.multi_reduction <maximumf>, %6, %cst_5 [1] : vector<8x128xf32> to vector<8xf32>
    %8 = vector.shape_cast %7 : vector<8xf32> to vector<8x1xf32>
    %9 = vector.broadcast %8 : vector<8x1xf32> to vector<8x128xf32>
    %10 = arith.subf %6, %9 : vector<8x128xf32>
    %11 = math.exp %10 : vector<8x128xf32>
    %cst_6 = arith.constant dense<0.000000e+00> : vector<8xf32>
    %12 = vector.multi_reduction <add>, %11, %cst_6 [1] : vector<8x128xf32> to vector<8xf32>
    %13 = vector.shape_cast %12 : vector<8xf32> to vector<8x1xf32>
    %14 = vector.broadcast %13 : vector<8x1xf32> to vector<8x128xf32>
    %15 = arith.divf %11, %14 : vector<8x128xf32>
    %c0_7 = arith.constant 0 : index
    %c0_8 = arith.constant 0 : index
    %16 = vector.load %arg4[%c0_7, %c0_8] : memref<8x128xf32, #tpu.memory_space<vmem>>, vector<8x128xf32>
    tpu.vector_store %arg4[%c0_7, %c0_8], %15 {strides = array<i32>} : memref<8x128xf32, #tpu.memory_space<vmem>>, vector<8x128xf32>,
    return
  }
  func.func @transform_0(%arg0: i32) -> (i32, i32) {
    %c0_i32 = arith.constant 0 : i32
    %c0_i32_0 = arith.constant 0 : i32
    return %arg0, %c0_i32 : i32, i32
  }
  func.func @transform_1(%arg0: i32) -> (i32, i32) {
    %c0_i32 = arith.constant 0 : i32
    %c0_i32_0 = arith.constant 0 : i32
    %c0_i32_1 = arith.constant 0 : i32
    return %c0_i32, %c0_i32_0 : i32, i32
  }
  func.func @transform_2(%arg0: i32) -> (i32, i32) {
    %c0_i32 = arith.constant 0 : i32
    %c0_i32_0 = arith.constant 0 : i32
    %c0_i32_1 = arith.constant 0 : i32
    return %c0_i32, %c0_i32_0 : i32, i32
  }
  func.func @transform_3(%arg0: i32) -> (i32, i32) {
    %c0_i32 = arith.constant 0 : i32
    %c0_i32_0 = arith.constant 0 : i32
    return %arg0, %c0_i32 : i32, i32
  }
}

</mosaic_0001>

<llo_original>
// kernel: cls_head.1
$region0: #{cls_head.1}
  #allocation0 [shape = 'u32[]', space=smem, size = 0x4, offset = 0x4, fixed_abs, tag = 'smem constant byte address 0x4 - core index']
  #allocation1 [shape = 'u32[72,128]{1,0:T(1,128)}', space=vmem, size = 0x9000, scoped, tag = 'internal scratch']
  %s0 = inlined_call_operand.hbm [shape: f32[8,768], index: 0, kind: input, shape index: {}]
  %s1 = inlined_call_operand.hbm [shape: bf16[768,128], index: 1, kind: input, shape index: {}]
  %s2 = inlined_call_operand.vmem [shape: f32[1,128], index: 2, kind: input, shape index: {}]
  %s3 = inlined_call_operand.vmem [shape: f32[8,128], index: 3, kind: output, shape index: {}]
  %s4 = sld [smem:[#allocation0]]
  $region30: #{cls_head.1} parent=0
    _
  %s6 = ssub.s32 1, %s4
  %s7 = scalar_select 0, %s6, %s4
  $region1: #{cls_head.1} parent=0
    #allocation2 [shape = 'u8[24576]{0}', space=vmem, size = 0x6000, scoped, tag = 'input window, operand 0, single buffered']
    #allocation3 [shape = 's32[1]{0}', space=sflag, size = 0x4, scoped, tag = 'scoped memory for cls_head.1']
    #allocation4 [shape = 'u8[196608]{0}', space=vmem, size = 0x30000, scoped, tag = 'input window, operand 1, single buffered']
    #allocation5 [shape = 's32[1]{0}', space=sflag, size = 0x4, scoped, tag = 'scoped memory for cls_head.1']
    %8 = vsyncpa [#allocation3], 0
    %9 = vsyncpa [#allocation5], 0
    // Predicated region
    $region2: #{cls_head.1} parent=1 // pred_check
      _
    $region3: #{cls_head.1} parent=1 // pred_check_branch
      %11 = sbr.rel (0) target = $region5
    $region4: #{cls_head.1} parent=1 // pred_region
      %13 = vsyncadd [#allocation3], 0
      %s15 = sshll.u32 %s0, 4
      %s16 = int_to_ptr.hbm [resolvable:$true] %s15
      %s17 = sshll.u32 [#allocation2], 4
      %s18 = int_to_ptr.vmem [resolvable:$true] %s17
      %20 = dma.hbm_to_vmem [thread:$0]  %s16, 768, %s18, [#allocation3]
    $region5: #{cls_head.1} parent=1 // pred_fallthru
      _
    // Predicated region
    $region6: #{cls_head.1} parent=1 // pred_check
      _
    $region7: #{cls_head.1} parent=1 // pred_check_branch
      %22 = sbr.rel (0) target = $region9
    $region8: #{cls_head.1} parent=1 // pred_region
      %24 = vsyncadd [#allocation5], 0
      %s25 = sshll.u32 %s1, 4
      %s26 = int_to_ptr.hbm [resolvable:$true] %s25
      %s27 = sshll.u32 [#allocation4], 4
      %s28 = int_to_ptr.vmem [resolvable:$true] %s27
      %33 = dma.hbm_to_vmem [thread:$0]  %s26, 6144, %s28, [#allocation5], 64, 64, 4
    $region9: #{cls_head.1} parent=1 // pred_fallthru
      _
    // Predicated region
    $region10: #{cls_head.1} parent=1 // pred_check
      _
    $region11: #{cls_head.1} parent=1 // pred_check_branch
      %35 = sbr.rel (0) target = $region13
    $region12: #{cls_head.1} parent=1 // pred_region
      _
    $region13: #{cls_head.1} parent=1 // pred_fallthru
      _
    // Predicated region
    $region14: #{cls_head.1} parent=1 // pred_check
      _
    $region15: #{cls_head.1} parent=1 // pred_check_branch
      %37 = sbr.rel (0) target = $region17
    $region16: #{cls_head.1} parent=1 // pred_region
      %39 = dma.done [#allocation3], 768
    $region17: #{cls_head.1} parent=1 // pred_fallthru
      _
    // Predicated region
    $region18: #{cls_head.1} parent=1 // pred_check
      _
    $region19: #{cls_head.1} parent=1 // pred_check_branch
      %41 = sbr.rel (0) target = $region21
    $region20: #{cls_head.1} parent=1 // pred_region
      %43 = dma.done [#allocation5], 6144
    $region21: #{cls_head.1} parent=1 // pred_fallthru
      _
    %v44 = vld [vmem:[#allocation2] sm:$0xff]
    %v45 = vld [vmem:[#allocation2 + $0x8] sm:$0xff]
    %v46 = vld [vmem:[#allocation2 + $0x10] sm:$0xff]
    %v47 = vld [vmem:[#allocation2 + $0x18] sm:$0xff]
    %v48 = vld [vmem:[#allocation2 + $0x20] sm:$0xff]
    %v49 = vld [vmem:[#allocation2 + $0x28] sm:$0xff]
    %v50 = vpack.c.bf16 %v44, %v44
    %v51 = vpack.c.bf16 %v45, %v45
    %v52 = vpack.c.bf16 %v46, %v46
    %v53 = vpack.c.bf16 %v47, %v47
    %v54 = vpack.c.bf16 %v48, %v48
    %v55 = vpack.c.bf16 %v49, %v49
    %v56 = vld [vmem:[#allocation4] sm:$0xf]
    %v57 = vld [vmem:[#allocation4 + $0x4] sm:$0xf]
    %v58 = vld [vmem:[#allocation4 + $0x8] sm:$0xf]
    %v59 = vld [vmem:[#allocation4 + $0xc] sm:$0xf]
    %v60 = vld [vmem:[#allocation4 + $0x10] sm:$0xf]
    %v61 = vld [vmem:[#allocation4 + $0x14] sm:$0xf]
    %v62 = vld [vmem:[#allocation4 + $0x18] sm:$0xf]
    %v63 = vld [vmem:[#allocation4 + $0x1c] sm:$0xf]
    %v64 = vld [vmem:[#allocation4 + $0x20] sm:$0xf]
    %v65 = vld [vmem:[#allocation4 + $0x24] sm:$0xf]
    %v66 = vld [vmem:[#allocation4 + $0x28] sm:$0xf]
    %v67 = vld [vmem:[#allocation4 + $0x2c] sm:$0xf]
    %v68 = vld [vmem:[#allocation4 + $0x30] sm:$0xf]
    %v69 = vld [vmem:[#allocation4 + $0x34] sm:$0xf]
    %v70 = vld [vmem:[#allocation4 + $0x38] sm:$0xf]
    %v71 = vld [vmem:[#allocation4 + $0x3c] sm:$0xf]
    %v72 = vld [vmem:[#allocation4 + $0x40] sm:$0xf]
    %v73 = vld [vmem:[#allocation4 + $0x44] sm:$0xf]
    %v74 = vld [vmem:[#allocation4 + $0x48] sm:$0xf]
    %v75 = vld [vmem:[#allocation4 + $0x4c] sm:$0xf]
    %v76 = vld [vmem:[#allocation4 + $0x50] sm:$0xf]
    %v77 = vld [vmem:[#allocation4 + $0x54] sm:$0xf]
    %v78 = vld [vmem:[#allocation4 + $0x58] sm:$0xf]
    %v79 = vld [vmem:[#allocation4 + $0x5c] sm:$0xf]
    %v80 = vld [vmem:[#allocation4 + $0x60] sm:$0xf]
    %v81 = vld [vmem:[#allocation4 + $0x64] sm:$0xf]
    %v82 = vld [vmem:[#allocation4 + $0x68] sm:$0xf]
    %v83 = vld [vmem:[#allocation4 + $0x6c] sm:$0xf]
    %v84 = vld [vmem:[#allocation4 + $0x70] sm:$0xf]
    %v85 = vld [vmem:[#allocation4 + $0x74] sm:$0xf]
    %v86 = vld [vmem:[#allocation4 + $0x78] sm:$0xf]
    %v87 = vld [vmem:[#allocation4 + $0x7c] sm:$0xf]
    %v88 = vld [vmem:[#allocation4 + $0x80] sm:$0xf]
    %v89 = vld [vmem:[#allocation4 + $0x84] sm:$0xf]
    %v90 = vld [vmem:[#allocation4 + $0x88] sm:$0xf]
    %v91 = vld [vmem:[#allocation4 + $0x8c] sm:$0xf]
    %v92 = vld [vmem:[#allocation4 + $0x90] sm:$0xf]
    %v93 = vld [vmem:[#allocation4 + $0x94] sm:$0xf]
    %v94 = vld [vmem:[#allocation4 + $0x98] sm:$0xf]
    %v95 = vld [vmem:[#allocation4 + $0x9c] sm:$0xf]
    %v96 = vld [vmem:[#allocation4 + $0xa0] sm:$0xf]
    %v97 = vld [vmem:[#allocation4 + $0xa4] sm:$0xf]
    %v98 = vld [vmem:[#allocation4 + $0xa8] sm:$0xf]
    %v99 = vld [vmem:[#allocation4 + $0xac] sm:$0xf]
    %v100 = vld [vmem:[#allocation4 + $0xb0] sm:$0xf]
    %v101 = vld [vmem:[#allocation4 + $0xb4] sm:$0xf]
    %v102 = vld [vmem:[#allocation4 + $0xb8] sm:$0xf]
    %v103 = vld [vmem:[#allocation4 + $0xbc] sm:$0xf]
    %v104 = vld [vmem:[#allocation4 + $0xc0] sm:$0xf]
    %v105 = vld [vmem:[#allocation4 + $0xc4] sm:$0xf]
    %v106 = vld [vmem:[#allocation4 + $0xc8] sm:$0xf]
    %v107 = vld [vmem:[#allocation4 + $0xcc] sm:$0xf]
    %v108 = vld [vmem:[#allocation4 + $0xd0] sm:$0xf]
    %v109 = vld [vmem:[#allocation4 + $0xd4] sm:$0xf]
    %v110 = vld [vmem:[#allocation4 + $0xd8] sm:$0xf]
    %v111 = vld [vmem:[#allocation4 + $0xdc] sm:$0xf]
    %v112 = vld [vmem:[#allocation4 + $0xe0] sm:$0xf]
    %v113 = vld [vmem:[#allocation4 + $0xe4] sm:$0xf]
    %v114 = vld [vmem:[#allocation4 + $0xe8] sm:$0xf]
    %v115 = vld [vmem:[#allocation4 + $0xec] sm:$0xf]
    %v116 = vld [vmem:[#allocation4 + $0xf0] sm:$0xf]
    %v117 = vld [vmem:[#allocation4 + $0xf4] sm:$0xf]
    %v118 = vld [vmem:[#allocation4 + $0xf8] sm:$0xf]
    %v119 = vld [vmem:[#allocation4 + $0xfc] sm:$0xf]
    %v120 = vld [vmem:[#allocation4 + $0x100] sm:$0xf]
    %v121 = vld [vmem:[#allocation4 + $0x104] sm:$0xf]
    %v122 = vld [vmem:[#allocation4 + $0x108] sm:$0xf]
    %v123 = vld [vmem:[#allocation4 + $0x10c] sm:$0xf]
    %v124 = vld [vmem:[#allocation4 + $0x110] sm:$0xf]
    %v125 = vld [vmem:[#allocation4 + $0x114] sm:$0xf]
    %v126 = vld [vmem:[#allocation4 + $0x118] sm:$0xf]
    %v127 = vld [vmem:[#allocation4 + $0x11c] sm:$0xf]
    %v128 = vld [vmem:[#allocation4 + $0x120] sm:$0xf]
    %v129 = vld [vmem:[#allocation4 + $0x124] sm:$0xf]
    %v130 = vld [vmem:[#allocation4 + $0x128] sm:$0xf]
    %v131 = vld [vmem:[#allocation4 + $0x12c] sm:$0xf]
    %v132 = vld [vmem:[#allocation4 + $0x130] sm:$0xf]
    %v133 = vld [vmem:[#allocation4 + $0x134] sm:$0xf]
    %v134 = vld [vmem:[#allocation4 + $0x138] sm:$0xf]
    %v135 = vld [vmem:[#allocation4 + $0x13c] sm:$0xf]
    %v136 = vld [vmem:[#allocation4 + $0x140] sm:$0xf]
    %v137 = vld [vmem:[#allocation4 + $0x144] sm:$0xf]
    %v138 = vld [vmem:[#allocation4 + $0x148] sm:$0xf]
    %v139 = vld [vmem:[#allocation4 + $0x14c] sm:$0xf]
    %v140 = vld [vmem:[#allocation4 + $0x150] sm:$0xf]
    %v141 = vld [vmem:[#allocation4 + $0x154] sm:$0xf]
    %v142 = vld [vmem:[#allocation4 + $0x158] sm:$0xf]
    %v143 = vld [vmem:[#allocation4 + $0x15c] sm:$0xf]
    %v144 = vld [vmem:[#allocation4 + $0x160] sm:$0xf]
    %v145 = vld [vmem:[#allocation4 + $0x164] sm:$0xf]
    %v146 = vld [vmem:[#allocation4 + $0x168] sm:$0xf]
    %v147 = vld [vmem:[#allocation4 + $0x16c] sm:$0xf]
    %v148 = vld [vmem:[#allocation4 + $0x170] sm:$0xf]
    %v149 = vld [vmem:[#allocation4 + $0x174] sm:$0xf]
    %v150 = vld [vmem:[#allocation4 + $0x178] sm:$0xf]
    %v151 = vld [vmem:[#allocation4 + $0x17c] sm:$0xf]
    %v152 = vld [vmem:[%s2] sm:$0x1]
    %v154 = vperm.slane %v152, 0
    %v252 = vunpack.c.l.b16 %v56
    %v253 = vunpack.c.l.b16 %v57
    %v254 = vunpack.c.l.b16 %v58
    %v255 = vunpack.c.l.b16 %v59
    %v256 = vunpack.c.l.b16 %v60
    %v257 = vunpack.c.l.b16 %v61
    %v258 = vunpack.c.l.b16 %v62
    %v259 = vunpack.c.l.b16 %v63
    %v260 = vunpack.c.l.b16 %v64
    %v261 = vunpack.c.l.b16 %v65
    %v262 = vunpack.c.l.b16 %v66
    %v263 = vunpack.c.l.b16 %v67
    %v264 = vunpack.c.l.b16 %v68
    %v265 = vunpack.c.l.b16 %v69
    %v266 = vunpack.c.l.b16 %v70
    %v267 = vunpack.c.l.b16 %v71
    %v268 = vunpack.c.l.b16 %v72
    %v269 = vunpack.c.l.b16 %v73
    %v270 = vunpack.c.l.b16 %v74
    %v271 = vunpack.c.l.b16 %v75
    %v272 = vunpack.c.l.b16 %v76
    %v273 = vunpack.c.l.b16 %v77
    %v274 = vunpack.c.l.b16 %v78
    %v275 = vunpack.c.l.b16 %v79
    %v276 = vunpack.c.l.b16 %v80
    %v277 = vunpack.c.l.b16 %v81
    %v278 = vunpack.c.l.b16 %v82
    %v279 = vunpack.c.l.b16 %v83
    %v280 = vunpack.c.l.b16 %v84
    %v281 = vunpack.c.l.b16 %v85
    %v282 = vunpack.c.l.b16 %v86
    %v283 = vunpack.c.l.b16 %v87
    %v284 = vunpack.c.l.b16 %v88
    %v285 = vunpack.c.l.b16 %v89
    %v286 = vunpack.c.l.b16 %v90
    %v287 = vunpack.c.l.b16 %v91
    %v288 = vunpack.c.l.b16 %v92
    %v289 = vunpack.c.l.b16 %v93
    %v290 = vunpack.c.l.b16 %v94
    %v291 = vunpack.c.l.b16 %v95
    %v292 = vunpack.c.l.b16 %v96
    %v293 = vunpack.c.l.b16 %v97
    %v294 = vunpack.c.l.b16 %v98
    %v295 = vunpack.c.l.b16 %v99
    %v296 = vunpack.c.l.b16 %v100
    %v297 = vunpack.c.l.b16 %v101
    %v298 = vunpack.c.l.b16 %v102
    %v299 = vunpack.c.l.b16 %v103
    %v300 = vunpack.c.l.b16 %v104
    %v301 = vunpack.c.l.b16 %v105
    %v302 = vunpack.c.l.b16 %v106
    %v303 = vunpack.c.l.b16 %v107
    %v304 = vunpack.c.l.b16 %v108
    %v305 = vunpack.c.l.b16 %v109
    %v306 = vunpack.c.l.b16 %v110
    %v307 = vunpack.c.l.b16 %v111
    %v308 = vunpack.c.l.b16 %v112
    %v309 = vunpack.c.l.b16 %v113
    %v310 = vunpack.c.l.b16 %v114
    %v311 = vunpack.c.l.b16 %v115
    %v312 = vunpack.c.l.b16 %v116
    %v313 = vunpack.c.l.b16 %v117
    %v314 = vunpack.c.l.b16 %v118
    %v315 = vunpack.c.l.b16 %v119
    %v316 = vunpack.c.l.b16 %v120
    %v317 = vunpack.c.l.b16 %v121
    %v318 = vunpack.c.l.b16 %v122
    %v319 = vunpack.c.l.b16 %v123
    %v320 = vunpack.c.l.b16 %v124
    %v321 = vunpack.c.l.b16 %v125
    %v322 = vunpack.c.l.b16 %v126
    %v323 = vunpack.c.l.b16 %v127
    %v324 = vunpack.c.l.b16 %v128
    %v325 = vunpack.c.l.b16 %v129
    %v326 = vunpack.c.l.b16 %v130
    %v327 = vunpack.c.l.b16 %v131
    %v328 = vunpack.c.l.b16 %v132
    %v329 = vunpack.c.l.b16 %v133
    %v330 = vunpack.c.l.b16 %v134
    %v331 = vunpack.c.l.b16 %v135
    %v332 = vunpack.c.l.b16 %v136
    %v333 = vunpack.c.l.b16 %v137
    %v334 = vunpack.c.l.b16 %v138
    %v335 = vunpack.c.l.b16 %v139
    %v336 = vunpack.c.l.b16 %v140
    %v337 = vunpack.c.l.b16 %v141
    %v338 = vunpack.c.l.b16 %v142
    %v339 = vunpack.c.l.b16 %v143
    %v340 = vunpack.c.l.b16 %v144
    %v341 = vunpack.c.l.b16 %v145
    %v342 = vunpack.c.l.b16 %v146
    %v343 = vunpack.c.l.b16 %v147
    %v344 = vunpack.c.l.b16 %v148
    %v345 = vunpack.c.l.b16 %v149
    %v346 = vunpack.c.l.b16 %v150
    %v347 = vunpack.c.l.b16 %v151
    %v348 = vpack.c.b16 %v253, %v252
    %v349 = vpack.c.b16 %v255, %v254
    %v350 = vpack.c.b16 %v257, %v256
    %v351 = vpack.c.b16 %v259, %v258
    %v352 = vpack.c.b16 %v261, %v260
    %v353 = vpack.c.b16 %v263, %v262
    %v354 = vpack.c.b16 %v265, %v264
    %v355 = vpack.c.b16 %v267, %v266
    %v356 = vpack.c.b16 %v269, %v268
    %v357 = vpack.c.b16 %v271, %v270
    %v358 = vpack.c.b16 %v273, %v272
    %v359 = vpack.c.b16 %v275, %v274
    %v360 = vpack.c.b16 %v277, %v276
    %v361 = vpack.c.b16 %v279, %v278
    %v362 = vpack.c.b16 %v281, %v280
    %v363 = vpack.c.b16 %v283, %v282
    %v364 = vpack.c.b16 %v285, %v284
    %v365 = vpack.c.b16 %v287, %v286
    %v366 = vpack.c.b16 %v289, %v288
    %v367 = vpack.c.b16 %v291, %v290
    %v368 = vpack.c.b16 %v293, %v292
    %v369 = vpack.c.b16 %v295, %v294
    %v370 = vpack.c.b16 %v297, %v296
    %v371 = vpack.c.b16 %v299, %v298
    %v372 = vpack.c.b16 %v301, %v300
    %v373 = vpack.c.b16 %v303, %v302
    %v374 = vpack.c.b16 %v305, %v304
    %v375 = vpack.c.b16 %v307, %v306
    %v376 = vpack.c.b16 %v309, %v308
    %v377 = vpack.c.b16 %v311, %v310
    %v378 = vpack.c.b16 %v313, %v312
    %v379 = vpack.c.b16 %v315, %v314
    %v380 = vpack.c.b16 %v317, %v316
    %v381 = vpack.c.b16 %v319, %v318
    %v382 = vpack.c.b16 %v321, %v320
    %v383 = vpack.c.b16 %v323, %v322
    %v384 = vpack.c.b16 %v325, %v324
    %v385 = vpack.c.b16 %v327, %v326
    %v386 = vpack.c.b16 %v329, %v328
    %v387 = vpack.c.b16 %v331, %v330
    %v388 = vpack.c.b16 %v333, %v332
    %v389 = vpack.c.b16 %v335, %v334
    %v390 = vpack.c.b16 %v337, %v336
    %v391 = vpack.c.b16 %v339, %v338
    %v392 = vpack.c.b16 %v341, %v340
    %v393 = vpack.c.b16 %v343, %v342
    %v394 = vpack.c.b16 %v345, %v344
    %v395 = vpack.c.b16 %v347, %v346
    %444 = vmatpush.bf16.msra.mxu0 %v355
    %445 = vmatpush.bf16.msra.mxu0 %v354
    %446 = vmatpush.bf16.msra.mxu0 %v353
    %447 = vmatpush.bf16.msra.mxu0 %v352
    %448 = vmatpush.bf16.msra.mxu0 %v351
    %449 = vmatpush.bf16.msra.mxu0 %v350
    %450 = vmatpush.bf16.msra.mxu0 %v349
    %451 = vmatpush.bf16.msra.mxu0 %v348
    %452 = vmatmul.bf16.gmra.mxu0 %v50
    %v453 = vpop.f32.mrf.mxu0
    %v454 = vadd.f32 %v154, %v453
    %v455 = vpop.f32.mrf.mxu0
    %456 = vdwg.mxu0
    %457 = vmatpush.bf16.msra.mxu0 %v363
    %458 = vmatpush.bf16.msra.mxu0 %v362
    %459 = vmatpush.bf16.msra.mxu0 %v361
    %460 = vmatpush.bf16.msra.mxu0 %v360
    %461 = vmatpush.bf16.msra.mxu0 %v359
    %462 = vmatpush.bf16.msra.mxu0 %v358
    %463 = vmatpush.bf16.msra.mxu0 %v357
    %464 = vmatpush.bf16.msra.mxu0 %v356
    %465 = vmatmul.bf16.gmra.mxu0 %v51
    %v466 = vpop.f32.mrf.mxu0
    %v467 = vadd.f32 %v454, %v466
    %v468 = vpop.f32.mrf.mxu0
    %469 = vdwg.mxu0
    %470 = vmatpush.bf16.msra.mxu0 %v371
    %471 = vmatpush.bf16.msra.mxu0 %v370
    %472 = vmatpush.bf16.msra.mxu0 %v369
    %473 = vmatpush.bf16.msra.mxu0 %v368
    %474 = vmatpush.bf16.msra.mxu0 %v367
    %475 = vmatpush.bf16.msra.mxu0 %v366
    %476 = vmatpush.bf16.msra.mxu0 %v365
    %477 = vmatpush.bf16.msra.mxu0 %v364
    %478 = vmatmul.bf16.gmra.mxu0 %v52
    %v479 = vpop.f32.mrf.mxu0
    %v480 = vadd.f32 %v467, %v479
    %v481 = vpop.f32.mrf.mxu0
    %482 = vdwg.mxu0
    %483 = vmatpush.bf16.msra.mxu0 %v379
    %484 = vmatpush.bf16.msra.mxu0 %v378
    %485 = vmatpush.bf16.msra.mxu0 %v377
    %486 = vmatpush.bf16.msra.mxu0 %v376
    %487 = vmatpush.bf16.msra.mxu0 %v375
    %488 = vmatpush.bf16.msra.mxu0 %v374
    %489 = vmatpush.bf16.msra.mxu0 %v373
    %490 = vmatpush.bf16.msra.mxu0 %v372
    %491 = vmatmul.bf16.gmra.mxu0 %v53
    %v492 = vpop.f32.mrf.mxu0
    %v493 = vadd.f32 %v480, %v492
    %v494 = vpop.f32.mrf.mxu0
    %495 = vdwg.mxu0
    %496 = vmatpush.bf16.msra.mxu0 %v387
    %497 = vmatpush.bf16.msra.mxu0 %v386
    %498 = vmatpush.bf16.msra.mxu0 %v385
    %499 = vmatpush.bf16.msra.mxu0 %v384
    %500 = vmatpush.bf16.msra.mxu0 %v383
    %501 = vmatpush.bf16.msra.mxu0 %v382
    %502 = vmatpush.bf16.msra.mxu0 %v381
    %503 = vmatpush.bf16.msra.mxu0 %v380
    %504 = vmatmul.bf16.gmra.mxu0 %v54
    %v505 = vpop.f32.mrf.mxu0
    %v506 = vadd.f32 %v493, %v505
    %v507 = vpop.f32.mrf.mxu0
    %508 = vdwg.mxu0
    %509 = vmatpush.bf16.msra.mxu0 %v395
    %510 = vmatpush.bf16.msra.mxu0 %v394
    %511 = vmatpush.bf16.msra.mxu0 %v393
    %512 = vmatpush.bf16.msra.mxu0 %v392
    %513 = vmatpush.bf16.msra.mxu0 %v391
    %514 = vmatpush.bf16.msra.mxu0 %v390
    %515 = vmatpush.bf16.msra.mxu0 %v389
    %516 = vmatpush.bf16.msra.mxu0 %v388
    %517 = vmatmul.bf16.gmra.mxu0 %v55
    %v518 = vpop.f32.mrf.mxu0
    %v519 = vadd.f32 %v506, %v518
    %v520 = vpop.f32.mrf.mxu0
    %521 = vdwg.mxu0
    %522 = vmax.xlane.f32.xlu0 %v519
    %v523 = vpop.xlane.xlu0 %522
    %v524 = vsub.f32 %v519, %v523
    %v525 = vmul.f32 %v524, 1.442695
    %v526 = vpow.pop %v525
    %527 = vadd.xlane.f32.xlu0 %v526
    %v528 = vpop.xlane.xlu0 %527
    %v529 = vrcp.pop %v528
    %v530 = vmul.f32 %v528, %v529
    %v531 = vsub.f32 1.0, %v530
    %v532 = vmul.f32 %v529, %v531
    %v533 = vadd.f32 %v529, %v532
    %vm534 = vweird.f32 %v528
    %vm535 = vweird.f32 %v529
    %vm536 = vmor %vm534, %vm535
    %v537 = vsel %vm536, %v529, %v533
    %v538 = vand.u32 2147483647, %v528
    %vm539 = vcmp.eq.f32.partialorder %v538, 8.507059e+37
    %v540 = vand.u32 %v528, 2147483648
    %v541 = vor.u32 1.1754944e-38, %v540
    %v542 = vsel %vm539, %v541, %v537
    %v543 = vmul.f32 %v526, %v542
    %544 = vst [vmem:[%s3] sm:$0xff] %v543
    // Predicated region
    $region22: #{cls_head.1} parent=1 // pred_check
      _
    $region23: #{cls_head.1} parent=1 // pred_check_branch
      %546 = sbr.rel (0) target = $region25
    $region24: #{cls_head.1} parent=1 // pred_region
      _
    $region25: #{cls_head.1} parent=1 // pred_fallthru
      _
    // Predicated region
    $region26: #{cls_head.1} parent=1 // pred_check
      _
    $region27: #{cls_head.1} parent=1 // pred_check_branch
      %548 = sbr.rel (0) target = $region29
    $region28: #{cls_head.1} parent=1 // pred_region
      _
    $region29: #{cls_head.1} parent=1 // pred_fallthru
      _
    %549 = vsyncpa [#allocation3], 1
    %550 = vsyncpa [#allocation5], 1

</llo_original>
